<compile_context>
chip_gen: v7x
topology: tpu7x:2x2x1
jax: 0.10.0
libtpu: 0.0.40
codegen_flags: <defaults>
</compile_context>

<pallas_src>
import jax
import jax.numpy as jnp
from jax.experimental import pallas as pl
from jax.experimental.pallas import tpu as pltpu


def _round_up(x, m):
    return ((x + m - 1) // m) * m


def decoder_attn_kernel(all_ref, last_ref, mask_ref,
                        wu_ref, ww_ref, wv_ref, bv_ref,
                        wr1_ref, wr2_ref, br_ref, out_ref):
    TB, S, H = all_ref.shape

    all_mem = all_ref[...]            # (TB, S, H)  == all_memory_values block
    last_mem = last_ref[...]          # (TB, H)     == last_memory_values block

    # U_repeat(all_memory) / W_repeat(last_memory); dropout == identity.
    # Batch*seq rows on the sublane axis, hidden on lanes -> one real GEMM.
    all_proj = jnp.dot(all_mem.reshape(TB * S, H), wu_ref[...],
                       preferred_element_type=jnp.float32)            # (TB*S, H)
    last_proj = jnp.dot(last_mem, ww_ref[...],
                        preferred_element_type=jnp.float32)            # (TB, H)

    # tanh(all + last.repeat over seq)
    er = jnp.tanh(all_proj.reshape(TB, S, H) + last_proj[:, None, :])  # (TB, S, H)

    # V_repeat(er) as a lane reduction over H so the softmax axis (S) is on lanes.
    scores = jnp.sum(er * wv_ref[...].reshape(1, 1, H), axis=-1) + bv_ref[0]  # (TB, S)
    scores = jnp.where(mask_ref[...] != 0, jnp.float32(-1000000000.0), scores)

    # softmax over the sequence axis (lane axis)
    m = jnp.max(scores, axis=-1, keepdims=True)                        # (TB, 1)
    e = jnp.exp(scores - m)
    alpha = e / jnp.sum(e, axis=-1, keepdims=True)                     # (TB, S)

    # Attention context: batched (1,S)@(S,H) MXU contraction over S.
    out_r = jnp.einsum('bqs,bsh->bqh', alpha[:, None, :], all_mem,
                       preferred_element_type=jnp.float32).reshape(TB, H)

    # Repeat(cat([out_r, last_memory])) split into two GEMMs (exact).
    logits = (jnp.dot(out_r, wr1_ref[...], preferred_element_type=jnp.float32)
              + jnp.dot(last_mem, wr2_ref[...], preferred_element_type=jnp.float32)
              + br_ref[...])                                           # (TB, N_pad)
    out_ref[...] = jax.nn.sigmoid(logits)


def decoder_forward(all_memory, last_memory, mask, params, *, block_b=128):
    """all_memory (B,S,H) f32, last_memory (B,H) f32, mask (B,S) bool -> (B,N) f32."""
    B, S, H = all_memory.shape
    N = params["br"].shape[-1]
    Np = _round_up(N, 128)            # lane-dense output slab

    TB = min(block_b, B)              # samples per grid step
    Bp = _round_up(B, TB)

    mask_i = mask.astype(jnp.int32)   # lane-dense (B, S), nonzero = masked
    if Bp != B:
        pad = Bp - B
        all_memory = jnp.pad(all_memory, ((0, pad), (0, 0), (0, 0)))
        last_memory = jnp.pad(last_memory, ((0, pad), (0, 0)))
        mask_i = jnp.pad(mask_i, ((0, pad), (0, 0)), constant_values=1)

    wr1, wr2, br = params["wr1"], params["wr2"], params["br"]
    if Np != N:
        wr1 = jnp.pad(wr1, ((0, 0), (0, Np - N)))
        wr2 = jnp.pad(wr2, ((0, 0), (0, Np - N)))
        br = jnp.pad(br, ((0, 0), (0, Np - N)))
    wv_row = params["wv"].reshape(1, H)     # V_repeat weight as a row vector
    bv = params["bv"].reshape(1)            # V_repeat bias scalar -> SMEM

    out = pl.pallas_call(
        decoder_attn_kernel,
        out_shape=jax.ShapeDtypeStruct((Bp, Np), jnp.float32),
        grid_spec=pltpu.PrefetchScalarGridSpec(
            num_scalar_prefetch=0,
            grid=(Bp // TB,),
            in_specs=[
                pl.BlockSpec((TB, S, H), lambda b: (b, 0, 0)),     # all_memory
                pl.BlockSpec((TB, H), lambda b: (b, 0)),           # last_memory
                pl.BlockSpec((TB, S), lambda b: (b, 0)),           # mask (int32)
                pl.BlockSpec((H, H), lambda b: (0, 0)),            # U_repeat W^T
                pl.BlockSpec((H, H), lambda b: (0, 0)),            # W_repeat W^T
                pl.BlockSpec((1, H), lambda b: (0, 0)),            # V_repeat W (row)
                pl.BlockSpec(memory_space=pltpu.MemorySpace.SMEM), # V_repeat bias
                pl.BlockSpec((H, Np), lambda b: (0, 0)),           # Repeat W^T [:H]
                pl.BlockSpec((H, Np), lambda b: (0, 0)),           # Repeat W^T [H:]
                pl.BlockSpec((1, Np), lambda b: (0, 0)),           # Repeat bias
            ],
            out_specs=pl.BlockSpec((TB, Np), lambda b: (b, 0)),
        ),
        compiler_params=pltpu.CompilerParams(
            dimension_semantics=("parallel",)),
    )(all_memory, last_memory, mask_i,
      params["wu"], params["ww"], wv_row, bv,
      wr1, wr2, br)
    return out[:B, :N]


def decoder_reference(all_memory, last_memory, mask, params):
    """Pure-JAX reference mirroring the PyTorch forward (attention=True, eval)."""
    all_proj = all_memory @ params["wu"]
    last_proj = last_memory @ params["ww"]
    er = jnp.tanh(all_proj + last_proj[:, None, :])
    scores = (er @ params["wv"])[..., 0] + params["bv"][0, 0]     # (B, S)
    scores = jnp.where(mask, -1000000000.0, scores)
    alpha = jax.nn.softmax(scores, axis=-1)
    out_r = jnp.einsum('bs,bsh->bh', alpha, all_memory)           # (B, H)
    cat = jnp.concatenate([out_r, last_memory], axis=1)           # (B, 2H)
    wr = jnp.concatenate([params["wr1"], params["wr2"]], axis=0)
    logits = cat @ wr + params["br"][0]
    return jax.nn.sigmoid(logits)


if __name__ == "__main__":
    B, S, H, N = 2, 8, 32, 64   # batch, seq_len, hidden_size, num_item
    key = jax.random.PRNGKey(0)
    ks = jax.random.split(key, 8)

    all_memory = jax.random.normal(ks[0], (B, S, H), dtype=jnp.float32)
    last_memory = jax.random.normal(ks[1], (B, H), dtype=jnp.float32)
    # mask[b, s] = True where position is padded (s >= length[b])
    lengths = jnp.array([S, 5])
    mask = jnp.arange(S)[None, :] >= lengths[:, None]       # (B, S) bool

    scale = 0.1
    params = {
        # stored as (in_features, out_features) == PyTorch weight.T
        "wu": scale * jax.random.normal(ks[2], (H, H), dtype=jnp.float32),
        "ww": scale * jax.random.normal(ks[3], (H, H), dtype=jnp.float32),
        "wv": scale * jax.random.normal(ks[4], (H, 1), dtype=jnp.float32),
        "bv": scale * jax.random.normal(ks[5], (1, 1), dtype=jnp.float32),
        "wr1": scale * jax.random.normal(ks[6], (H, N), dtype=jnp.float32),
        "wr2": scale * jax.random.normal(ks[7], (H, N), dtype=jnp.float32),
        "br": jnp.zeros((1, N), dtype=jnp.float32),
    }
    # TODO(synk): attention=False branch (sigmoid(Linear(last_memory))) not exercised here.

    out = jax.block_until_ready(decoder_forward(all_memory, last_memory, mask, params))
    ref = decoder_reference(all_memory, last_memory, mask, params)

    assert out.shape == (B, N)
    max_err = float(jnp.max(jnp.abs(out - ref)))
    assert max_err < 1e-4, f"mismatch vs reference: {max_err}"
    print("KERNEL_OK")
</pallas_src>

<mosaic_0001>
module attributes {stable_mosaic.version = 11 : i64} {
  func.func @decoder_attn_kernel(%arg0: i32, %arg1: memref<2x8x32xf32, #tpu.memory_space<vmem>>, %arg2: memref<2x32xf32, #tpu.memory_space<vmem>>, %arg3: memref<2x8xi32, #tpu.memory_space<vmem>>, %arg4: memref<32x32xf32, #tpu.memory_space<vmem>>, %arg5: memref<32x32xf32, #tpu.memory_space<vmem>>, %arg6: memref<1x32xf32, #tpu.memory_space<vmem>>, %arg7: memref<1xf32, #tpu.memory_space<smem>>, %arg8: memref<32x128xf32, #tpu.memory_space<vmem>>, %arg9: memref<32x128xf32, #tpu.memory_space<vmem>>, %arg10: memref<1x128xf32, #tpu.memory_space<vmem>>, %arg11: memref<2x128xf32, #tpu.memory_space<vmem>>) attributes {dimension_semantics = [#tpu.dimension_semantics<parallel>], iteration_bounds = array<i64: 1>, scalar_prefetch = 0 : i64, scratch_operands = 0 : i64, tpu.core_type = #tpu.core_type<tc>, window_params = [{transform_indices = @transform_0, window_bounds = array<i64: 2, 8, 32>}, {transform_indices = @transform_1, window_bounds = array<i64: 2, 32>}, {transform_indices = @transform_2, window_bounds = array<i64: 2, 8>}, {pipeline_mode = #tpu.pipeline_mode<synchronous>, transform_indices = @transform_3, window_bounds = array<i64: 32, 32>}, {pipeline_mode = #tpu.pipeline_mode<synchronous>, transform_indices = @transform_4, window_bounds = array<i64: 32, 32>}, {pipeline_mode = #tpu.pipeline_mode<synchronous>, transform_indices = @transform_5, window_bounds = array<i64: 1, 32>}, {transform_indices = @transform_6, window_bounds = array<i64: 1>}, {pipeline_mode = #tpu.pipeline_mode<synchronous>, transform_indices = @transform_7, window_bounds = array<i64: 32, 128>}, {pipeline_mode = #tpu.pipeline_mode<synchronous>, transform_indices = @transform_8, window_bounds = array<i64: 32, 128>}, {pipeline_mode = #tpu.pipeline_mode<synchronous>, transform_indices = @transform_9, window_bounds = array<i64: 1, 128>}, {transform_indices = @transform_10, window_bounds = array<i64: 2, 128>}]} {
    %c0 = arith.constant 0 : index
    %c0_0 = arith.constant 0 : index
    %c0_1 = arith.constant 0 : index
    %0 = vector.load %arg1[%c0, %c0_0, %c0_1] : memref<2x8x32xf32, #tpu.memory_space<vmem>>, vector<2x8x32xf32>
    %c0_2 = arith.constant 0 : index
    %c0_3 = arith.constant 0 : index
    %1 = vector.load %arg2[%c0_2, %c0_3] : memref<2x32xf32, #tpu.memory_space<vmem>>, vector<2x32xf32>
    %2 = vector.shape_cast %0 : vector<2x8x32xf32> to vector<16x32xf32>
    %c0_4 = arith.constant 0 : index
    %c0_5 = arith.constant 0 : index
    %3 = vector.load %arg4[%c0_4, %c0_5] : memref<32x32xf32, #tpu.memory_space<vmem>>, vector<32x32xf32>
    %cst = arith.constant dense<0.000000e+00> : vector<16x32xf32>
    %4 = tpu.matmul %2, %3, %cst {dimension_numbers = #tpu.dot_dimension_numbers<[1], [0], [0], [1], [0, 0, 1, 1], [], []>} : vector<16x32xf32>, vector<32x32xf32>, vector<16x32xf32> -> vector<16x32xf32>
    %c0_6 = arith.constant 0 : index
    %c0_7 = arith.constant 0 : index
    %5 = vector.load %arg5[%c0_6, %c0_7] : memref<32x32xf32, #tpu.memory_space<vmem>>, vector<32x32xf32>
    %cst_8 = arith.constant dense<0.000000e+00> : vector<2x32xf32>
    %6 = tpu.matmul %1, %5, %cst_8 {dimension_numbers = #tpu.dot_dimension_numbers<[1], [0], [0], [1], [0, 0, 1, 1], [], []>} : vector<2x32xf32>, vector<32x32xf32>, vector<2x32xf32> -> vector<2x32xf32>
    %7 = vector.shape_cast %4 : vector<16x32xf32> to vector<2x8x32xf32>
    %8 = vector.shape_cast %6 : vector<2x32xf32> to vector<2x1x32xf32>
    %9 = vector.broadcast %8 : vector<2x1x32xf32> to vector<2x8x32xf32>
    %10 = arith.addf %7, %9 : vector<2x8x32xf32>
    %11 = math.tanh %10 : vector<2x8x32xf32>
    %c0_9 = arith.constant 0 : index
    %c0_10 = arith.constant 0 : index
    %12 = vector.load %arg6[%c0_9, %c0_10] : memref<1x32xf32, #tpu.memory_space<vmem>>, vector<1x32xf32>
    %13 = vector.shape_cast %12 : vector<1x32xf32> to vector<1x1x32xf32>
    %14 = vector.broadcast %13 : vector<1x1x32xf32> to vector<2x8x32xf32>
    %15 = arith.mulf %11, %14 : vector<2x8x32xf32>
    %cst_11 = arith.constant dense<0.000000e+00> : vector<2x8xf32>
    %16 = vector.multi_reduction <add>, %15, %cst_11 [2] : vector<2x8x32xf32> to vector<2x8xf32>
    %c0_12 = arith.constant 0 : index
    %17 = memref.load %arg7[%c0_12] : memref<1xf32, #tpu.memory_space<smem>>
    %18 = vector.broadcast %17 : f32 to vector<2x8xf32>
    %19 = arith.addf %16, %18 : vector<2x8xf32>
    %c0_13 = arith.constant 0 : index
    %c0_14 = arith.constant 0 : index
    %20 = vector.load %arg3[%c0_13, %c0_14] : memref<2x8xi32, #tpu.memory_space<vmem>>, vector<2x8xi32>
    %c0_i32 = arith.constant 0 : i32
    %21 = vector.broadcast %c0_i32 : i32 to vector<2x8xi32>
    %22 = arith.cmpi ne, %20, %21 : vector<2x8xi32>
    %cst_15 = arith.constant -1.000000e+09 : f32
    %23 = vector.broadcast %cst_15 : f32 to vector<2x8xf32>
    %24 = arith.select %22, %23, %19 : vector<2x8xi1>, vector<2x8xf32>
    %cst_16 = arith.constant dense<0xFF800000> : vector<2xf32>
    %25 = vector.multi_reduction <maximumf>, %24, %cst_16 [1] : vector<2x8xf32> to vector<2xf32>
    %26 = vector.shape_cast %25 : vector<2xf32> to vector<2x1xf32>
    %27 = vector.broadcast %26 : vector<2x1xf32> to vector<2x8xf32>
    %28 = arith.subf %24, %27 : vector<2x8xf32>
    %29 = math.exp %28 : vector<2x8xf32>
    %cst_17 = arith.constant dense<0.000000e+00> : vector<2xf32>
    %30 = vector.multi_reduction <add>, %29, %cst_17 [1] : vector<2x8xf32> to vector<2xf32>
    %31 = vector.shape_cast %30 : vector<2xf32> to vector<2x1xf32>
    %32 = vector.broadcast %31 : vector<2x1xf32> to vector<2x8xf32>
    %33 = arith.divf %29, %32 : vector<2x8xf32>
    %34 = vector.shape_cast %33 : vector<2x8xf32> to vector<2x1x8xf32>
    "tpu.trace_start"() <{level = 10 : i32, message = "bqs,bsh->bqh"}> : () -> ()
    %cst_18 = arith.constant dense<0.000000e+00> : vector<2x1x32xf32>
    %35 = tpu.matmul %34, %0, %cst_18 {dimension_numbers = #tpu.dot_dimension_numbers<[2], [1], [1], [2], [0, 0, 0, 1, 1, 2], [0], [0]>} : vector<2x1x8xf32>, vector<2x8x32xf32>, vector<2x1x32xf32> -> vector<2x1x32xf32>
    "tpu.trace_stop"() : () -> ()
    %36 = vector.shape_cast %35 : vector<2x1x32xf32> to vector<2x32xf32>
    %c0_19 = arith.constant 0 : index
    %c0_20 = arith.constant 0 : index
    %37 = vector.load %arg8[%c0_19, %c0_20] : memref<32x128xf32, #tpu.memory_space<vmem>>, vector<32x128xf32>
    %cst_21 = arith.constant dense<0.000000e+00> : vector<2x128xf32>
    %38 = tpu.matmul %36, %37, %cst_21 {dimension_numbers = #tpu.dot_dimension_numbers<[1], [0], [0], [1], [0, 0, 1, 1], [], []>} : vector<2x32xf32>, vector<32x128xf32>, vector<2x128xf32> -> vector<2x128xf32>
    %c0_22 = arith.constant 0 : index
    %c0_23 = arith.constant 0 : index
    %39 = vector.load %arg9[%c0_22, %c0_23] : memref<32x128xf32, #tpu.memory_space<vmem>>, vector<32x128xf32>
    %cst_24 = arith.constant dense<0.000000e+00> : vector<2x128xf32>
    %40 = tpu.matmul %1, %39, %cst_24 {dimension_numbers = #tpu.dot_dimension_numbers<[1], [0], [0], [1], [0, 0, 1, 1], [], []>} : vector<2x32xf32>, vector<32x128xf32>, vector<2x128xf32> -> vector<2x128xf32>
    %41 = arith.addf %38, %40 : vector<2x128xf32>
    %c0_25 = arith.constant 0 : index
    %c0_26 = arith.constant 0 : index
    %42 = vector.load %arg10[%c0_25, %c0_26] : memref<1x128xf32, #tpu.memory_space<vmem>>, vector<1x128xf32>
    %43 = vector.broadcast %42 : vector<1x128xf32> to vector<2x128xf32>
    %44 = arith.addf %41, %43 : vector<2x128xf32>
    %45 = arith.negf %44 : vector<2x128xf32>
    %46 = math.exp %45 : vector<2x128xf32>
    %cst_27 = arith.constant 1.000000e+00 : f32
    %47 = vector.broadcast %cst_27 : f32 to vector<2x128xf32>
    %48 = arith.addf %47, %46 : vector<2x128xf32>
    %49 = arith.divf %47, %48 : vector<2x128xf32>
    %c0_28 = arith.constant 0 : index
    %c0_29 = arith.constant 0 : index
    %50 = vector.load %arg11[%c0_28, %c0_29] : memref<2x128xf32, #tpu.memory_space<vmem>>, vector<2x128xf32>
    tpu.vector_store %arg11[%c0_28, %c0_29], %49 {strides = array<i32>} : memref<2x128xf32, #tpu.memory_space<vmem>>, vector<2x128xf32>,
    return
  }
  func.func @transform_0(%arg0: i32) -> (i32, i32, i32) {
    %c0_i32 = arith.constant 0 : i32
    %c0_i32_0 = arith.constant 0 : i32
    %c0_i32_1 = arith.constant 0 : i32
    return %arg0, %c0_i32, %c0_i32_0 : i32, i32, i32
  }
  func.func @transform_1(%arg0: i32) -> (i32, i32) {
    %c0_i32 = arith.constant 0 : i32
    %c0_i32_0 = arith.constant 0 : i32
    return %arg0, %c0_i32 : i32, i32
  }
  func.func @transform_2(%arg0: i32) -> (i32, i32) {
    %c0_i32 = arith.constant 0 : i32
    %c0_i32_0 = arith.constant 0 : i32
    return %arg0, %c0_i32 : i32, i32
  }
  func.func @transform_3(%arg0: i32) -> (i32, i32) {
    %c0_i32 = arith.constant 0 : i32
    %c0_i32_0 = arith.constant 0 : i32
    %c0_i32_1 = arith.constant 0 : i32
    return %c0_i32, %c0_i32_0 : i32, i32
  }
  func.func @transform_4(%arg0: i32) -> (i32, i32) {
    %c0_i32 = arith.constant 0 : i32
    %c0_i32_0 = arith.constant 0 : i32
    %c0_i32_1 = arith.constant 0 : i32
    return %c0_i32, %c0_i32_0 : i32, i32
  }
  func.func @transform_5(%arg0: i32) -> (i32, i32) {
    %c0_i32 = arith.constant 0 : i32
    %c0_i32_0 = arith.constant 0 : i32
    %c0_i32_1 = arith.constant 0 : i32
    return %c0_i32, %c0_i32_0 : i32, i32
  }
  func.func @transform_6(%arg0: i32) -> i32 {
    %c0_i32 = arith.constant 0 : i32
    %c0_i32_0 = arith.constant 0 : i32
    return %c0_i32 : i32
  }
  func.func @transform_7(%arg0: i32) -> (i32, i32) {
    %c0_i32 = arith.constant 0 : i32
    %c0_i32_0 = arith.constant 0 : i32
    %c0_i32_1 = arith.constant 0 : i32
    return %c0_i32, %c0_i32_0 : i32, i32
  }
  func.func @transform_8(%arg0: i32) -> (i32, i32) {
    %c0_i32 = arith.constant 0 : i32
    %c0_i32_0 = arith.constant 0 : i32
    %c0_i32_1 = arith.constant 0 : i32
    return %c0_i32, %c0_i32_0 : i32, i32
  }
  func.func @transform_9(%arg0: i32) -> (i32, i32) {
    %c0_i32 = arith.constant 0 : i32
    %c0_i32_0 = arith.constant 0 : i32
    %c0_i32_1 = arith.constant 0 : i32
    return %c0_i32, %c0_i32_0 : i32, i32
  }
  func.func @transform_10(%arg0: i32) -> (i32, i32) {
    %c0_i32 = arith.constant 0 : i32
    %c0_i32_0 = arith.constant 0 : i32
    return %arg0, %c0_i32 : i32, i32
  }
}

</mosaic_0001>

<llo_original>
// kernel: tpu_custom_call.1
$region0: #{tpu_custom_call.1}
  #allocation0 [shape = 'u32[]', space=smem, size = 0x4, offset = 0x4, fixed_abs, tag = 'smem constant byte address 0x4 - core index']
  #allocation1 [shape = 'u32[144,128]{1,0:T(1,128)}', space=vmem, size = 0x12000, scoped, tag = 'internal scratch']
  #allocation2 [shape = 'f32[1]{0:T(128)S(6)}', space=smem, size = 0x200, scoped, tag = 'scoped memory for tpu_custom_call.1']
  %s0 = inlined_call_operand.hbm [shape: f32[2,8,32], index: 0, kind: input, shape index: {}]
  %s1 = inlined_call_operand.vmem [shape: f32[2,32], index: 1, kind: input, shape index: {}]
  %s2 = inlined_call_operand.vmem [shape: s32[2,8], index: 2, kind: input, shape index: {}]
  %s3 = inlined_call_operand.hbm [shape: f32[32,32], index: 3, kind: input, shape index: {}]
  %s4 = inlined_call_operand.hbm [shape: f32[32,32], index: 4, kind: input, shape index: {}]
  %s5 = inlined_call_operand.vmem [shape: f32[1,32], index: 5, kind: input, shape index: {}]
  %s6 = inlined_call_operand.<no memory space> [shape: f32[1], index: 6, kind: input, shape index: {}]
  %s7 = inlined_call_operand.hbm [shape: f32[32,128], index: 7, kind: input, shape index: {}]
  %s8 = inlined_call_operand.hbm [shape: f32[32,128], index: 8, kind: input, shape index: {}]
  %s9 = inlined_call_operand.vmem [shape: f32[1,128], index: 9, kind: input, shape index: {}]
  %s10 = inlined_call_operand.hbm [shape: f32[2,128], index: 10, kind: output, shape index: {}]
  %s11 = sld [smem:[#allocation0]]
  $region70: #{tpu_custom_call.1} parent=0
    _
  %s13 = ssub.s32 1, %s11
  %s14 = scalar_select 0, %s13, %s11
  %15 = sst [smem:[#allocation2]] %s6
  $region1: #{tpu_custom_call.1} parent=0
    #allocation3 [shape = 'u8[8192]{0}', space=vmem, size = 0x2000, scoped, tag = 'input window, operand 0, single buffered']
    #allocation4 [shape = 's32[1]{0}', space=sflag, size = 0x4, scoped, tag = 'scoped memory for tpu_custom_call.1']
    #allocation5 [shape = 's32[1]{0}', space=sflag, size = 0x4, scoped, tag = 'scoped memory for tpu_custom_call.1']
    #allocation6 [shape = 'u8[16384]{0}', space=vmem, size = 0x4000, scoped, tag = 'input window, operand 3, single buffered']
    #allocation7 [shape = 's32[1]{0}', space=sflag, size = 0x4, scoped, tag = 'scoped memory for tpu_custom_call.1']
    #allocation8 [shape = 'u8[16384]{0}', space=vmem, size = 0x4000, scoped, tag = 'input window, operand 4, single buffered']
    #allocation9 [shape = 'u8[16384]{0}', space=vmem, size = 0x4000, scoped, tag = 'input window, operand 7, single buffered']
    #allocation10 [shape = 's32[1]{0}', space=sflag, size = 0x4, scoped, tag = 'scoped memory for tpu_custom_call.1']
    #allocation11 [shape = 'u8[16384]{0}', space=vmem, size = 0x4000, scoped, tag = 'input window, operand 8, single buffered']
    #allocation12 [shape = 'u8[1024]{0}', space=vmem, size = 0x400, scoped, tag = 'output window, operand 0, single buffered']
    %16 = vsyncpa [#allocation4], 0
    %17 = vsyncpa [#allocation7], 0
    %18 = vsyncpa [#allocation10], 0
    %19 = vsyncpa [#allocation5], 0
    // Predicated region
    $region2: #{tpu_custom_call.1} parent=1 // pred_check
      _
    $region3: #{tpu_custom_call.1} parent=1 // pred_check_branch
      %21 = sbr.rel (0) target = $region5
    $region4: #{tpu_custom_call.1} parent=1 // pred_region
      %s23 = ssub.s32 256, 256
      %24 = vsyncadd [#allocation4], %s23
      %s25 = sshll.u32 [#allocation3], 4
      %s26 = int_to_ptr.vmem [resolvable:$true] %s25
      %31 = dma.hbm_to_vmem [thread:$0]  %s0, 256, %s26, [#allocation4], 128, 128, 8
    $region5: #{tpu_custom_call.1} parent=1 // pred_fallthru
      _
    // Predicated region
    $region6: #{tpu_custom_call.1} parent=1 // pred_check
      _
    $region7: #{tpu_custom_call.1} parent=1 // pred_check_branch
      %33 = sbr.rel (0) target = $region9
    $region8: #{tpu_custom_call.1} parent=1 // pred_region
      _
    $region9: #{tpu_custom_call.1} parent=1 // pred_fallthru
      _
    // Predicated region
    $region10: #{tpu_custom_call.1} parent=1 // pred_check
      _
    $region11: #{tpu_custom_call.1} parent=1 // pred_check_branch
      %35 = sbr.rel (0) target = $region13
    $region12: #{tpu_custom_call.1} parent=1 // pred_region
      _
    $region13: #{tpu_custom_call.1} parent=1 // pred_fallthru
      _
    // Predicated region
    $region14: #{tpu_custom_call.1} parent=1 // pred_check
      _
    $region15: #{tpu_custom_call.1} parent=1 // pred_check_branch
      %37 = sbr.rel (0) target = $region17
    $region16: #{tpu_custom_call.1} parent=1 // pred_region
      %s39 = ssub.s32 512, 512
      %40 = vsyncadd [#allocation7], %s39
      %s41 = sshll.u32 [#allocation6], 4
      %s42 = int_to_ptr.vmem [resolvable:$true] %s41
      %47 = dma.hbm_to_vmem [thread:$0]  %s3, 512, %s42, [#allocation7], 128, 128, 8
    $region17: #{tpu_custom_call.1} parent=1 // pred_fallthru
      _
    // Predicated region
    $region18: #{tpu_custom_call.1} parent=1 // pred_check
      _
    $region19: #{tpu_custom_call.1} parent=1 // pred_check_branch
      %49 = sbr.rel (0) target = $region21
    $region20: #{tpu_custom_call.1} parent=1 // pred_region
      %s51 = ssub.s32 512, 512
      %52 = vsyncadd [#allocation7], %s51
      %s53 = sshll.u32 [#allocation8], 4
      %s54 = int_to_ptr.vmem [resolvable:$true] %s53
      %59 = dma.hbm_to_vmem [thread:$0]  %s4, 512, %s54, [#allocation7], 128, 128, 8
    $region21: #{tpu_custom_call.1} parent=1 // pred_fallthru
      _
    // Predicated region
    $region22: #{tpu_custom_call.1} parent=1 // pred_check
      _
    $region23: #{tpu_custom_call.1} parent=1 // pred_check_branch
      %61 = sbr.rel (0) target = $region25
    $region24: #{tpu_custom_call.1} parent=1 // pred_region
      _
    $region25: #{tpu_custom_call.1} parent=1 // pred_fallthru
      _
    // Predicated region
    $region26: #{tpu_custom_call.1} parent=1 // pred_check
      _
    $region27: #{tpu_custom_call.1} parent=1 // pred_check_branch
      %63 = sbr.rel (0) target = $region29
    $region28: #{tpu_custom_call.1} parent=1 // pred_region
      _
    $region29: #{tpu_custom_call.1} parent=1 // pred_fallthru
      _
    // Predicated region
    $region30: #{tpu_custom_call.1} parent=1 // pred_check
      _
    $region31: #{tpu_custom_call.1} parent=1 // pred_check_branch
      %65 = sbr.rel (0) target = $region33
    $region32: #{tpu_custom_call.1} parent=1 // pred_region
      %s67 = ssub.s32 512, 512
      %68 = vsyncadd [#allocation10], %s67
      %s69 = sshll.u32 [#allocation9], 4
      %s70 = int_to_ptr.vmem [resolvable:$true] %s69
      %75 = dma.hbm_to_vmem [thread:$0]  %s7, 512, %s70, [#allocation10], 128, 128, 8
    $region33: #{tpu_custom_call.1} parent=1 // pred_fallthru
      _
    // Predicated region
    $region34: #{tpu_custom_call.1} parent=1 // pred_check
      _
    $region35: #{tpu_custom_call.1} parent=1 // pred_check_branch
      %77 = sbr.rel (0) target = $region37
    $region36: #{tpu_custom_call.1} parent=1 // pred_region
      %s79 = ssub.s32 512, 512
      %80 = vsyncadd [#allocation10], %s79
      %s81 = sshll.u32 [#allocation11], 4
      %s82 = int_to_ptr.vmem [resolvable:$true] %s81
      %87 = dma.hbm_to_vmem [thread:$0]  %s8, 512, %s82, [#allocation10], 128, 128, 8
    $region37: #{tpu_custom_call.1} parent=1 // pred_fallthru
      _
    // Predicated region
    $region38: #{tpu_custom_call.1} parent=1 // pred_check
      _
    $region39: #{tpu_custom_call.1} parent=1 // pred_check_branch
      %89 = sbr.rel (0) target = $region41
    $region40: #{tpu_custom_call.1} parent=1 // pred_region
      _
    $region41: #{tpu_custom_call.1} parent=1 // pred_fallthru
      _
    // Predicated region
    $region42: #{tpu_custom_call.1} parent=1 // pred_check
      _
    $region43: #{tpu_custom_call.1} parent=1 // pred_check_branch
      %91 = sbr.rel (0) target = $region45
    $region44: #{tpu_custom_call.1} parent=1 // pred_region
      %92 = dma.done [#allocation4], 256
    $region45: #{tpu_custom_call.1} parent=1 // pred_fallthru
      _
    // Predicated region
    $region46: #{tpu_custom_call.1} parent=1 // pred_check
      _
    $region47: #{tpu_custom_call.1} parent=1 // pred_check_branch
      %94 = sbr.rel (0) target = $region49
    $region48: #{tpu_custom_call.1} parent=1 // pred_region
      %95 = dma.done [#allocation7], 512
    $region49: #{tpu_custom_call.1} parent=1 // pred_fallthru
      _
    // Predicated region
    $region50: #{tpu_custom_call.1} parent=1 // pred_check
      _
    $region51: #{tpu_custom_call.1} parent=1 // pred_check_branch
      %97 = sbr.rel (0) target = $region53
    $region52: #{tpu_custom_call.1} parent=1 // pred_region
      %98 = dma.done [#allocation7], 512
    $region53: #{tpu_custom_call.1} parent=1 // pred_fallthru
      _
    // Predicated region
    $region54: #{tpu_custom_call.1} parent=1 // pred_check
      _
    $region55: #{tpu_custom_call.1} parent=1 // pred_check_branch
      %100 = sbr.rel (0) target = $region57
    $region56: #{tpu_custom_call.1} parent=1 // pred_region
      %101 = dma.done [#allocation10], 512
    $region57: #{tpu_custom_call.1} parent=1 // pred_fallthru
      _
    // Predicated region
    $region58: #{tpu_custom_call.1} parent=1 // pred_check
      _
    $region59: #{tpu_custom_call.1} parent=1 // pred_check_branch
      %103 = sbr.rel (0) target = $region61
    $region60: #{tpu_custom_call.1} parent=1 // pred_region
      %104 = dma.done [#allocation10], 512
    $region61: #{tpu_custom_call.1} parent=1 // pred_fallthru
      _
    %v105 = vld [vmem:[#allocation3] sm:$0xff]
    %v106 = vld [vmem:[#allocation3 + $0x8] sm:$0xff]
    %v107 = vld [vmem:[%s1] sm:$0x3]
    %v108 = vld [vmem:[#allocation6] sm:$0xff]
    %v109 = vld [vmem:[#allocation6 + $0x8] sm:$0xff]
    %v110 = vld [vmem:[#allocation6 + $0x10] sm:$0xff]
    %v111 = vld [vmem:[#allocation6 + $0x18] sm:$0xff]
    %vm112 = vcmask 261120
    %v114 = vsel %vm112, %v105, 0
    %v117 = vsel %vm112, %v106, 0
    %119 = vmatprep.subr.mxu0 0.0
    %120 = vmatpush1.msra.mxu0 %v108
    %121 = vmatprep.subr.mxu0 0.0
    %122 = vmatpush1.msra.mxu0 %v109
    %123 = vmatprep.subr.mxu0 0.0
    %124 = vmatpush1.msra.mxu0 %v110
    %125 = vmatprep.subr.mxu0 0.0
    %126 = vmatpush1.msra.mxu0 %v111
    %127 = vmatprep.subr.mxu0 0.0
    %128 = vmatpush1.msra.mxu0 0.0
    %129 = vmatprep.subr.mxu0 0.0
    %130 = vmatpush1.msra.mxu0 0.0
    %131 = vmatprep.subr.mxu0 0.0
    %132 = vmatpush1.msra.mxu0 0.0
    %133 = vmatprep.subr.mxu0 0.0
    %134 = vmatpush1.msra.mxu0 0.0
    %135 = vmatprep.subr.mxu0 0.0
    %136 = vmatpush1.msra.mxu0 0.0
    %137 = vmatprep.subr.mxu0 0.0
    %138 = vmatpush1.msra.mxu0 0.0
    %139 = vmatprep.subr.mxu0 0.0
    %140 = vmatpush1.msra.mxu0 0.0
    %141 = vmatprep.subr.mxu0 0.0
    %142 = vmatpush1.msra.mxu0 0.0
    %143 = vmatprep.subr.mxu0 0.0
    %144 = vmatpush1.msra.mxu0 0.0
    %145 = vmatprep.subr.mxu0 0.0
    %146 = vmatpush1.msra.mxu0 0.0
    %147 = vmatprep.subr.mxu0 0.0
    %148 = vmatpush1.msra.mxu0 0.0
    %149 = vmatprep.subr.mxu0 0.0
    %150 = vmatpush1.msra.mxu0 0.0
    %151 = vmatprep.subr.mxu0 0.0
    %152 = vmatpush1.msra.mxu0 0.0
    %153 = vmatprep.subr.mxu0 0.0
    %154 = vmatpush1.msra.mxu0 0.0
    %155 = vmatprep.subr.mxu0 0.0
    %156 = vmatpush1.msra.mxu0 0.0
    %157 = vmatprep.subr.mxu0 0.0
    %158 = vmatpush1.msra.mxu0 0.0
    %159 = vmatprep.subr.mxu0 0.0
    %160 = vmatpush1.msra.mxu0 0.0
    %161 = vmatprep.subr.mxu0 0.0
    %162 = vmatpush1.msra.mxu0 0.0
    %163 = vmatprep.subr.mxu0 0.0
    %164 = vmatpush1.msra.mxu0 0.0
    %165 = vmatprep.subr.mxu0 0.0
    %166 = vmatpush1.msra.mxu0 0.0
    %167 = vmatprep.subr.mxu0 0.0
    %168 = vmatpush1.msra.mxu0 0.0
    %169 = vmatprep.subr.mxu0 0.0
    %170 = vmatpush1.msra.mxu0 0.0
    %171 = vmatprep.subr.mxu0 0.0
    %172 = vmatpush1.msra.mxu0 0.0
    %173 = vmatprep.subr.mxu0 0.0
    %174 = vmatpush1.msra.mxu0 0.0
    %175 = vmatprep.subr.mxu0 0.0
    %176 = vmatpush1.msra.mxu0 0.0
    %177 = vmatprep.subr.mxu0 0.0
    %178 = vmatpush1.msra.mxu0 0.0
    %179 = vmatprep.subr.mxu0 0.0
    %180 = vmatpush1.msra.mxu0 0.0
    %181 = vmatprep.subr.mxu0 0.0
    %182 = vmatpush1.msra.mxu0 0.0
    %183 = vmatprep.mubr.f32.mxu0 0.0
    %184 = vmatmul.mubr.f32.gmra.mrb[0].mxu0 %v114
    %v185 = vpop.f32.mrb[0].mxu0
    %v186 = vadd.f32 0.0, %v185
    %v187 = vpop.f32.mrb[0].mxu0
    %188 = vmatprep.mubr.f32.mxu0 0.0
    %189 = vmatmul.mubr.f32.gmra.mrb[0].mxu0 %v117
    %v190 = vpop.f32.mrb[0].mxu0
    %v191 = vadd.f32 0.0, %v190
    %v192 = vpop.f32.mrb[0].mxu0
    %193 = vdwg.mxu0
    %v194 = vld [vmem:[#allocation8] sm:$0xff]
    %v195 = vld [vmem:[#allocation8 + $0x8] sm:$0xff]
    %v196 = vld [vmem:[#allocation8 + $0x10] sm:$0xff]
    %v197 = vld [vmem:[#allocation8 + $0x18] sm:$0xff]
    %v199 = vsel %vm112, %v107, 0
    %201 = vmatprep.subr.mxu0 0.0
    %202 = vmatpush1.msra.mxu0 %v194
    %203 = vmatprep.subr.mxu0 0.0
    %204 = vmatpush1.msra.mxu0 %v195
    %205 = vmatprep.subr.mxu0 0.0
    %206 = vmatpush1.msra.mxu0 %v196
    %207 = vmatprep.subr.mxu0 0.0
    %208 = vmatpush1.msra.mxu0 %v197
    %209 = vmatprep.subr.mxu0 0.0
    %210 = vmatpush1.msra.mxu0 0.0
    %211 = vmatprep.subr.mxu0 0.0
    %212 = vmatpush1.msra.mxu0 0.0
    %213 = vmatprep.subr.mxu0 0.0
    %214 = vmatpush1.msra.mxu0 0.0
    %215 = vmatprep.subr.mxu0 0.0
    %216 = vmatpush1.msra.mxu0 0.0
    %217 = vmatprep.subr.mxu0 0.0
    %218 = vmatpush1.msra.mxu0 0.0
    %219 = vmatprep.subr.mxu0 0.0
    %220 = vmatpush1.msra.mxu0 0.0
    %221 = vmatprep.subr.mxu0 0.0
    %222 = vmatpush1.msra.mxu0 0.0
    %223 = vmatprep.subr.mxu0 0.0
    %224 = vmatpush1.msra.mxu0 0.0
    %225 = vmatprep.subr.mxu0 0.0
    %226 = vmatpush1.msra.mxu0 0.0
    %227 = vmatprep.subr.mxu0 0.0
    %228 = vmatpush1.msra.mxu0 0.0
    %229 = vmatprep.subr.mxu0 0.0
    %230 = vmatpush1.msra.mxu0 0.0
    %231 = vmatprep.subr.mxu0 0.0
    %232 = vmatpush1.msra.mxu0 0.0
    %233 = vmatprep.subr.mxu0 0.0
    %234 = vmatpush1.msra.mxu0 0.0
    %235 = vmatprep.subr.mxu0 0.0
    %236 = vmatpush1.msra.mxu0 0.0
    %237 = vmatprep.subr.mxu0 0.0
    %238 = vmatpush1.msra.mxu0 0.0
    %239 = vmatprep.subr.mxu0 0.0
    %240 = vmatpush1.msra.mxu0 0.0
    %241 = vmatprep.subr.mxu0 0.0
    %242 = vmatpush1.msra.mxu0 0.0
    %243 = vmatprep.subr.mxu0 0.0
    %244 = vmatpush1.msra.mxu0 0.0
    %245 = vmatprep.subr.mxu0 0.0
    %246 = vmatpush1.msra.mxu0 0.0
    %247 = vmatprep.subr.mxu0 0.0
    %248 = vmatpush1.msra.mxu0 0.0
    %249 = vmatprep.subr.mxu0 0.0
    %250 = vmatpush1.msra.mxu0 0.0
    %251 = vmatprep.subr.mxu0 0.0
    %252 = vmatpush1.msra.mxu0 0.0
    %253 = vmatprep.subr.mxu0 0.0
    %254 = vmatpush1.msra.mxu0 0.0
    %255 = vmatprep.subr.mxu0 0.0
    %256 = vmatpush1.msra.mxu0 0.0
    %257 = vmatprep.subr.mxu0 0.0
    %258 = vmatpush1.msra.mxu0 0.0
    %259 = vmatprep.subr.mxu0 0.0
    %260 = vmatpush1.msra.mxu0 0.0
    %261 = vmatprep.subr.mxu0 0.0
    %262 = vmatpush1.msra.mxu0 0.0
    %263 = vmatprep.subr.mxu0 0.0
    %264 = vmatpush1.msra.mxu0 0.0
    %265 = vmatprep.mubr.f32.mxu0 0.0
    %266 = vmatmul.mubr.f32.gmra.mrb[0].mxu0 %v199
    %v267 = vpop.f32.mrb[0].mxu0
    %v268 = vadd.f32 0.0, %v267
    %v269 = vpop.f32.mrb[0].mxu0
    %270 = vdwg.mxu0
    %v273 = vunpack.c.l.s4 1966171168
    %v274 = vunpack.c.0.s8 %v273
    %v275 = vlaneseq
    %v276 = vshrl.u32 %v275, 7
    %v277 = vsub.s32 %v274, %v276
    %v278 = vrot.slane %v268, %v277
    %v279 = vcombine.high %v278, %v278
    %v281 = vunpack.c.l.s4 1966171168
    %v282 = vunpack.c.0.s8 %v281
    %v283 = vlaneseq
    %v284 = vshrl.u32 %v283, 7
    %v285 = vsub.s32 %v282, %v284
    %v286 = vrot.slane %v278, %v285
    %v288 = vunpack.c.l.s4 1966171168
    %v289 = vunpack.c.0.s8 %v288
    %v290 = vlaneseq
    %v291 = vshrl.u32 %v290, 7
    %v292 = vsub.s32 %v289, %v291
    %v293 = vrot.slane %v279, %v292
    %v294 = vlaneseq
    %v295 = vshrl.u32 %v294, 7
    %v296 = vsub.s32 0, %v295
    %v297 = vrot.slane %v286, %v296
    %v298 = vlaneseq
    %v299 = vshrl.u32 %v298, 7
    %v300 = vsub.s32 0, %v299
    %v301 = vrot.slane %v293, %v300
    %v304 = vadd.f32 %v186, %v297
    %v305 = vadd.f32 %v191, %v301
    %v306 = vtanh.pop %v304
    %v307 = vtanh.pop %v305
    %v308 = vld [vmem:[%s5] sm:$0x1]
    %v310 = vlaneseq
    %v311 = vshrl.u32 %v310, 7
    %v312 = vsub.s32 0, %v311
    %v313 = vrot.slane %v308, %v312
    %v315 = vmul.f32 %v306, %v313
    %v316 = vmul.f32 %v307, %v313
    %v317 = vsel %vm112, %v315, 0.0
    %318 = vadd.xlane.f32.xlu0 %v317
    %v319 = vpop.xlane.xlu0 %318
    %v320 = vsel %vm112, %v316, 0.0
    %321 = vadd.xlane.f32.xlu0 %v320
    %v322 = vpop.xlane.xlu0 %321
    %s323 = sld [smem:[#allocation2]]
    %v324 = vstv %s323
    %v325 = vadd.f32 %v319, %v324
    %v326 = vadd.f32 %v322, %v324
    %v327 = vld [vmem:[%s2] sm:$0x3]
    %vm328 = vcmp.ne.s32.totalorder %v327, 0
    %v331 = vlaneseq
    %v332 = vand.u32 %v331, 127
    %v333 = vlaneseq
    %v334 = vshrl.u32 %v333, 7
    %v335 = vsub.s32 %v332, %v334
    %v336 = vrot.slane %v325, %v335
    %v337 = vlaneseq
    %v338 = vshrl.u32 %v337, 7
    %v339 = vsub.s32 %v332, %v338
    %v340 = vrot.slane %v326, %v339
    %vm341 = vcmask 1041409
    %v342 = vsel %vm341, %v340, %v336
    %v344 = vsel %vm328, -1e+09, %v342
    %vm345 = vcmask 58368
    %v346 = vsel %vm345, %v344, -inf
    %347 = vmax.xlane.f32.xlu0 %v346
    %v348 = vpop.xlane.xlu0 %347
    %v349 = vsub.f32 %v344, %v348
    %v350 = vmul.f32 %v349, 1.442695
    %v351 = vpow.pop %v350
    %v352 = vsel %vm345, %v351, 0.0
    %353 = vadd.xlane.f32.xlu0 %v352
    %v354 = vpop.xlane.xlu0 %353
    %v355 = vrcp.pop %v354
    %v356 = vmul.f32 %v351, %v355
    %v359 = vunpack.c.l.s4 1966171168
    %v360 = vunpack.c.0.s8 %v359
    %v361 = vlaneseq
    %v362 = vshrl.u32 %v361, 7
    %v363 = vsub.s32 %v360, %v362
    %v364 = vrot.slane %v356, %v363
    %v365 = vcombine.high %v364, %v364
    %v367 = vunpack.c.l.s4 1966171168
    %v368 = vunpack.c.0.s8 %v367
    %v369 = vlaneseq
    %v370 = vshrl.u32 %v369, 7
    %v371 = vsub.s32 %v368, %v370
    %v372 = vrot.slane %v364, %v371
    %v374 = vunpack.c.l.s4 1966171168
    %v375 = vunpack.c.0.s8 %v374
    %v376 = vlaneseq
    %v377 = vshrl.u32 %v376, 7
    %v378 = vsub.s32 %v375, %v377
    %v379 = vrot.slane %v365, %v378
    %vm380 = vcmask 64512
    %v381 = vsel %vm380, %v372, 0
    %383 = vmatprep.subr.mxu0 0.0
    %384 = vmatpush1.msra.mxu0 %v105
    %385 = vmatprep.subr.mxu0 0.0
    %386 = vmatpush1.msra.mxu0 0.0
    %387 = vmatprep.subr.mxu0 0.0
    %388 = vmatpush1.msra.mxu0 0.0
    %389 = vmatprep.subr.mxu0 0.0
    %390 = vmatpush1.msra.mxu0 0.0
    %391 = vmatprep.subr.mxu0 0.0
    %392 = vmatpush1.msra.mxu0 0.0
    %393 = vmatprep.subr.mxu0 0.0
    %394 = vmatpush1.msra.mxu0 0.0
    %395 = vmatprep.subr.mxu0 0.0
    %396 = vmatpush1.msra.mxu0 0.0
    %397 = vmatprep.subr.mxu0 0.0
    %398 = vmatpush1.msra.mxu0 0.0
    %399 = vmatprep.subr.mxu0 0.0
    %400 = vmatpush1.msra.mxu0 0.0
    %401 = vmatprep.subr.mxu0 0.0
    %402 = vmatpush1.msra.mxu0 0.0
    %403 = vmatprep.subr.mxu0 0.0
    %404 = vmatpush1.msra.mxu0 0.0
    %405 = vmatprep.subr.mxu0 0.0
    %406 = vmatpush1.msra.mxu0 0.0
    %407 = vmatprep.subr.mxu0 0.0
    %408 = vmatpush1.msra.mxu0 0.0
    %409 = vmatprep.subr.mxu0 0.0
    %410 = vmatpush1.msra.mxu0 0.0
    %411 = vmatprep.subr.mxu0 0.0
    %412 = vmatpush1.msra.mxu0 0.0
    %413 = vmatprep.subr.mxu0 0.0
    %414 = vmatpush1.msra.mxu0 0.0
    %415 = vmatprep.subr.mxu0 0.0
    %416 = vmatpush1.msra.mxu0 0.0
    %417 = vmatprep.subr.mxu0 0.0
    %418 = vmatpush1.msra.mxu0 0.0
    %419 = vmatprep.subr.mxu0 0.0
    %420 = vmatpush1.msra.mxu0 0.0
    %421 = vmatprep.subr.mxu0 0.0
    %422 = vmatpush1.msra.mxu0 0.0
    %423 = vmatprep.subr.mxu0 0.0
    %424 = vmatpush1.msra.mxu0 0.0
    %425 = vmatprep.subr.mxu0 0.0
    %426 = vmatpush1.msra.mxu0 0.0
    %427 = vmatprep.subr.mxu0 0.0
    %428 = vmatpush1.msra.mxu0 0.0
    %429 = vmatprep.subr.mxu0 0.0
    %430 = vmatpush1.msra.mxu0 0.0
    %431 = vmatprep.subr.mxu0 0.0
    %432 = vmatpush1.msra.mxu0 0.0
    %433 = vmatprep.subr.mxu0 0.0
    %434 = vmatpush1.msra.mxu0 0.0
    %435 = vmatprep.subr.mxu0 0.0
    %436 = vmatpush1.msra.mxu0 0.0
    %437 = vmatprep.subr.mxu0 0.0
    %438 = vmatpush1.msra.mxu0 0.0
    %439 = vmatprep.subr.mxu0 0.0
    %440 = vmatpush1.msra.mxu0 0.0
    %441 = vmatprep.subr.mxu0 0.0
    %442 = vmatpush1.msra.mxu0 0.0
    %443 = vmatprep.subr.mxu0 0.0
    %444 = vmatpush1.msra.mxu0 0.0
    %445 = vmatprep.subr.mxu0 0.0
    %446 = vmatpush1.msra.mxu0 0.0
    %447 = vmatprep.mubr.f32.mxu0 0.0
    %448 = vmatmul.mubr.f32.gmra.mrb[0].mxu0 %v381
    %v449 = vpop.f32.mrb[0].mxu0
    %v450 = vadd.f32 0.0, %v449
    %v451 = vpop.f32.mrb[0].mxu0
    %452 = vdwg.mxu0
    %v453 = vsel %vm380, %v379, 0
    %455 = vmatprep.subr.mxu0 0.0
    %456 = vmatpush1.msra.mxu0 %v106
    %457 = vmatprep.subr.mxu0 0.0
    %458 = vmatpush1.msra.mxu0 0.0
    %459 = vmatprep.subr.mxu0 0.0
    %460 = vmatpush1.msra.mxu0 0.0
    %461 = vmatprep.subr.mxu0 0.0
    %462 = vmatpush1.msra.mxu0 0.0
    %463 = vmatprep.subr.mxu0 0.0
    %464 = vmatpush1.msra.mxu0 0.0
    %465 = vmatprep.subr.mxu0 0.0
    %466 = vmatpush1.msra.mxu0 0.0
    %467 = vmatprep.subr.mxu0 0.0
    %468 = vmatpush1.msra.mxu0 0.0
    %469 = vmatprep.subr.mxu0 0.0
    %470 = vmatpush1.msra.mxu0 0.0
    %471 = vmatprep.subr.mxu0 0.0
    %472 = vmatpush1.msra.mxu0 0.0
    %473 = vmatprep.subr.mxu0 0.0
    %474 = vmatpush1.msra.mxu0 0.0
    %475 = vmatprep.subr.mxu0 0.0
    %476 = vmatpush1.msra.mxu0 0.0
    %477 = vmatprep.subr.mxu0 0.0
    %478 = vmatpush1.msra.mxu0 0.0
    %479 = vmatprep.subr.mxu0 0.0
    %480 = vmatpush1.msra.mxu0 0.0
    %481 = vmatprep.subr.mxu0 0.0
    %482 = vmatpush1.msra.mxu0 0.0
    %483 = vmatprep.subr.mxu0 0.0
    %484 = vmatpush1.msra.mxu0 0.0
    %485 = vmatprep.subr.mxu0 0.0
    %486 = vmatpush1.msra.mxu0 0.0
    %487 = vmatprep.subr.mxu0 0.0
    %488 = vmatpush1.msra.mxu0 0.0
    %489 = vmatprep.subr.mxu0 0.0
    %490 = vmatpush1.msra.mxu0 0.0
    %491 = vmatprep.subr.mxu0 0.0
    %492 = vmatpush1.msra.mxu0 0.0
    %493 = vmatprep.subr.mxu0 0.0
    %494 = vmatpush1.msra.mxu0 0.0
    %495 = vmatprep.subr.mxu0 0.0
    %496 = vmatpush1.msra.mxu0 0.0
    %497 = vmatprep.subr.mxu0 0.0
    %498 = vmatpush1.msra.mxu0 0.0
    %499 = vmatprep.subr.mxu0 0.0
    %500 = vmatpush1.msra.mxu0 0.0
    %501 = vmatprep.subr.mxu0 0.0
    %502 = vmatpush1.msra.mxu0 0.0
    %503 = vmatprep.subr.mxu0 0.0
    %504 = vmatpush1.msra.mxu0 0.0
    %505 = vmatprep.subr.mxu0 0.0
    %506 = vmatpush1.msra.mxu0 0.0
    %507 = vmatprep.subr.mxu0 0.0
    %508 = vmatpush1.msra.mxu0 0.0
    %509 = vmatprep.subr.mxu0 0.0
    %510 = vmatpush1.msra.mxu0 0.0
    %511 = vmatprep.subr.mxu0 0.0
    %512 = vmatpush1.msra.mxu0 0.0
    %513 = vmatprep.subr.mxu0 0.0
    %514 = vmatpush1.msra.mxu0 0.0
    %515 = vmatprep.subr.mxu0 0.0
    %516 = vmatpush1.msra.mxu0 0.0
    %517 = vmatprep.subr.mxu0 0.0
    %518 = vmatpush1.msra.mxu0 0.0
    %519 = vmatprep.mubr.f32.mxu0 0.0
    %520 = vmatmul.mubr.f32.gmra.mrb[0].mxu0 %v453
    %v521 = vpop.f32.mrb[0].mxu0
    %v522 = vadd.f32 0.0, %v521
    %v523 = vpop.f32.mrb[0].mxu0
    %524 = vdwg.mxu0
    %v525 = vld [vmem:[#allocation9] sm:$0xff]
    %v526 = vld [vmem:[#allocation9 + $0x8] sm:$0xff]
    %v527 = vld [vmem:[#allocation9 + $0x10] sm:$0xff]
    %v528 = vld [vmem:[#allocation9 + $0x18] sm:$0xff]
    %v529 = vld [vmem:[#allocation11] sm:$0xff]
    %v530 = vld [vmem:[#allocation11 + $0x8] sm:$0xff]
    %v531 = vld [vmem:[#allocation11 + $0x10] sm:$0xff]
    %v532 = vld [vmem:[#allocation11 + $0x18] sm:$0xff]
    %533 = vmatprep.subr.mxu0 0.0
    %534 = vmatpush1.msra.mxu0 %v529
    %535 = vmatprep.subr.mxu0 0.0
    %536 = vmatpush1.msra.mxu0 %v530
    %537 = vmatprep.subr.mxu0 0.0
    %538 = vmatpush1.msra.mxu0 %v531
    %539 = vmatprep.subr.mxu0 0.0
    %540 = vmatpush1.msra.mxu0 %v532
    %541 = vmatprep.subr.mxu0 0.0
    %542 = vmatpush1.msra.mxu0 0.0
    %543 = vmatprep.subr.mxu0 0.0
    %544 = vmatpush1.msra.mxu0 0.0
    %545 = vmatprep.subr.mxu0 0.0
    %546 = vmatpush1.msra.mxu0 0.0
    %547 = vmatprep.subr.mxu0 0.0
    %548 = vmatpush1.msra.mxu0 0.0
    %549 = vmatprep.subr.mxu0 0.0
    %550 = vmatpush1.msra.mxu0 0.0
    %551 = vmatprep.subr.mxu0 0.0
    %552 = vmatpush1.msra.mxu0 0.0
    %553 = vmatprep.subr.mxu0 0.0
    %554 = vmatpush1.msra.mxu0 0.0
    %555 = vmatprep.subr.mxu0 0.0
    %556 = vmatpush1.msra.mxu0 0.0
    %557 = vmatprep.subr.mxu0 0.0
    %558 = vmatpush1.msra.mxu0 0.0
    %559 = vmatprep.subr.mxu0 0.0
    %560 = vmatpush1.msra.mxu0 0.0
    %561 = vmatprep.subr.mxu0 0.0
    %562 = vmatpush1.msra.mxu0 0.0
    %563 = vmatprep.subr.mxu0 0.0
    %564 = vmatpush1.msra.mxu0 0.0
    %565 = vmatprep.subr.mxu0 0.0
    %566 = vmatpush1.msra.mxu0 0.0
    %567 = vmatprep.subr.mxu0 0.0
    %568 = vmatpush1.msra.mxu0 0.0
    %569 = vmatprep.subr.mxu0 0.0
    %570 = vmatpush1.msra.mxu0 0.0
    %571 = vmatprep.subr.mxu0 0.0
    %572 = vmatpush1.msra.mxu0 0.0
    %573 = vmatprep.subr.mxu0 0.0
    %574 = vmatpush1.msra.mxu0 0.0
    %575 = vmatprep.subr.mxu0 0.0
    %576 = vmatpush1.msra.mxu0 0.0
    %577 = vmatprep.subr.mxu0 0.0
    %578 = vmatpush1.msra.mxu0 0.0
    %579 = vmatprep.subr.mxu0 0.0
    %580 = vmatpush1.msra.mxu0 0.0
    %581 = vmatprep.subr.mxu0 0.0
    %582 = vmatpush1.msra.mxu0 0.0
    %583 = vmatprep.subr.mxu0 0.0
    %584 = vmatpush1.msra.mxu0 0.0
    %585 = vmatprep.subr.mxu0 0.0
    %586 = vmatpush1.msra.mxu0 0.0
    %587 = vmatprep.subr.mxu0 0.0
    %588 = vmatpush1.msra.mxu0 0.0
    %589 = vmatprep.subr.mxu0 0.0
    %590 = vmatpush1.msra.mxu0 0.0
    %591 = vmatprep.subr.mxu0 0.0
    %592 = vmatpush1.msra.mxu0 0.0
    %593 = vmatprep.subr.mxu0 0.0
    %594 = vmatpush1.msra.mxu0 0.0
    %595 = vmatprep.subr.mxu0 0.0
    %596 = vmatpush1.msra.mxu0 0.0
    %597 = vmatprep.mubr.f32.mxu0 0.0
    %598 = vmatmul.mubr.f32.gmra.mrb[0].mxu0 %v199
    %v599 = vpop.f32.mrb[0].mxu0
    %v600 = vadd.f32 0.0, %v599
    %v601 = vpop.f32.mrb[0].mxu0
    %602 = vdwg.mxu0
    %v605 = vrot.slane %v522, 7
    %v606 = vsel %vm341, %v605, %v450
    %v607 = vsel %vm112, %v606, 0
    %609 = vmatprep.subr.mxu0 0.0
    %610 = vmatpush1.msra.mxu0 %v525
    %611 = vmatprep.subr.mxu0 0.0
    %612 = vmatpush1.msra.mxu0 %v526
    %613 = vmatprep.subr.mxu0 0.0
    %614 = vmatpush1.msra.mxu0 %v527
    %615 = vmatprep.subr.mxu0 0.0
    %616 = vmatpush1.msra.mxu0 %v528
    %617 = vmatprep.subr.mxu0 0.0
    %618 = vmatpush1.msra.mxu0 0.0
    %619 = vmatprep.subr.mxu0 0.0
    %620 = vmatpush1.msra.mxu0 0.0
    %621 = vmatprep.subr.mxu0 0.0
    %622 = vmatpush1.msra.mxu0 0.0
    %623 = vmatprep.subr.mxu0 0.0
    %624 = vmatpush1.msra.mxu0 0.0
    %625 = vmatprep.subr.mxu0 0.0
    %626 = vmatpush1.msra.mxu0 0.0
    %627 = vmatprep.subr.mxu0 0.0
    %628 = vmatpush1.msra.mxu0 0.0
    %629 = vmatprep.subr.mxu0 0.0
    %630 = vmatpush1.msra.mxu0 0.0
    %631 = vmatprep.subr.mxu0 0.0
    %632 = vmatpush1.msra.mxu0 0.0
    %633 = vmatprep.subr.mxu0 0.0
    %634 = vmatpush1.msra.mxu0 0.0
    %635 = vmatprep.subr.mxu0 0.0
    %636 = vmatpush1.msra.mxu0 0.0
    %637 = vmatprep.subr.mxu0 0.0
    %638 = vmatpush1.msra.mxu0 0.0
    %639 = vmatprep.subr.mxu0 0.0
    %640 = vmatpush1.msra.mxu0 0.0
    %641 = vmatprep.subr.mxu0 0.0
    %642 = vmatpush1.msra.mxu0 0.0
    %643 = vmatprep.subr.mxu0 0.0
    %644 = vmatpush1.msra.mxu0 0.0
    %645 = vmatprep.subr.mxu0 0.0
    %646 = vmatpush1.msra.mxu0 0.0
    %647 = vmatprep.subr.mxu0 0.0
    %648 = vmatpush1.msra.mxu0 0.0
    %649 = vmatprep.subr.mxu0 0.0
    %650 = vmatpush1.msra.mxu0 0.0
    %651 = vmatprep.subr.mxu0 0.0
    %652 = vmatpush1.msra.mxu0 0.0
    %653 = vmatprep.subr.mxu0 0.0
    %654 = vmatpush1.msra.mxu0 0.0
    %655 = vmatprep.subr.mxu0 0.0
    %656 = vmatpush1.msra.mxu0 0.0
    %657 = vmatprep.subr.mxu0 0.0
    %658 = vmatpush1.msra.mxu0 0.0
    %659 = vmatprep.subr.mxu0 0.0
    %660 = vmatpush1.msra.mxu0 0.0
    %661 = vmatprep.subr.mxu0 0.0
    %662 = vmatpush1.msra.mxu0 0.0
    %663 = vmatprep.subr.mxu0 0.0
    %664 = vmatpush1.msra.mxu0 0.0
    %665 = vmatprep.subr.mxu0 0.0
    %666 = vmatpush1.msra.mxu0 0.0
    %667 = vmatprep.subr.mxu0 0.0
    %668 = vmatpush1.msra.mxu0 0.0
    %669 = vmatprep.subr.mxu0 0.0
    %670 = vmatpush1.msra.mxu0 0.0
    %671 = vmatprep.subr.mxu0 0.0
    %672 = vmatpush1.msra.mxu0 0.0
    %673 = vmatprep.mubr.f32.mxu0 0.0
    %674 = vmatmul.mubr.f32.gmra.mrb[0].mxu0 %v607
    %v675 = vpop.f32.mrb[0].mxu0
    %v676 = vadd.f32 %v600, %v675
    %v677 = vpop.f32.mrb[0].mxu0
    %678 = vdwg.mxu0
    %v679 = vld [vmem:[%s9] sm:$0x1]
    %v681 = vlaneseq
    %v682 = vshrl.u32 %v681, 7
    %v683 = vsub.s32 0, %v682
    %v684 = vrot.slane %v679, %v683
    %v686 = vadd.f32 %v676, %v684
    %v687 = vxor.u32 %v686, 2147483648
    %v688 = vmul.f32 %v687, 1.442695
    %v689 = vpow.pop %v688
    %v690 = vadd.f32 %v689, 1.0
    %v691 = vrcp.pop %v690
    %v692 = vmul.f32 1.0, %v691
    %693 = vst [vmem:[#allocation12] sm:$0x3] %v692
    // Predicated region
    $region62: #{tpu_custom_call.1} parent=1 // pred_check
      _
    $region63: #{tpu_custom_call.1} parent=1 // pred_check_branch
      %695 = sbr.rel (0) target = $region65
    $region64: #{tpu_custom_call.1} parent=1 // pred_region
      %s697 = ssub.s32 32, 32
      %698 = vsyncadd [#allocation5], %s697
      %s700 = sshll.u32 [#allocation12], 4
      %s701 = int_to_ptr.vmem [resolvable:$true] %s700
      %703 = dma.vmem_to_hbm [thread:$0]  %s701, 32, %s10, [#allocation5]
    $region65: #{tpu_custom_call.1} parent=1 // pred_fallthru
      _
    // Predicated region
    $region66: #{tpu_custom_call.1} parent=1 // pred_check
      _
    $region67: #{tpu_custom_call.1} parent=1 // pred_check_branch
      %705 = sbr.rel (0) target = $region69
    $region68: #{tpu_custom_call.1} parent=1 // pred_region
      %706 = dma.done [#allocation5], 32
    $region69: #{tpu_custom_call.1} parent=1 // pred_fallthru
      _
    %707 = vsyncpa [#allocation4], 1
    %708 = vsyncpa [#allocation7], 1
    %709 = vsyncpa [#allocation10], 1
    %710 = vsyncpa [#allocation5], 1

</llo_original>
